<compile_context>
chip_gen: v5e
topology: v5e:2x2
jax: 0.10.0
libtpu: 0.0.40
codegen_flags: <defaults>
</compile_context>

<pallas_src>
import functools

import jax
import jax.numpy as jnp
from jax.experimental import pallas as pl
from jax.experimental.pallas import tpu as pltpu


def _round_up(x, m):
    return ((x + m - 1) // m) * m


def _choose_tile_rows(B, C):
    """Byte-targeted batch tile: ~4 MiB of f32 logits, 16-row aligned."""
    if B <= 16:
        return B  # single full-extent tile (block dims == array dims)

    target_bytes = 4 * 2**20
    tb = _round_up(max(16, target_bytes // (C * 4)), 16)

    # VMEM safety: double-buffered f32 logits + bf16 labels inputs, plus
    # roughly six live f32 (tb, C) temporaries inside the body.
    per_row_bytes = C * 4 * 2 + C * 2 * 2 + C * 4 * 6
    budget = 40 * 2**20
    while tb > 16 and tb * per_row_bytes > budget:
        tb = _round_up(max(16, tb // 2), 16)

    # Keep at least two tiles when possible (v7x has 2 TensorCores and the
    # batch axis is marked 'parallel').
    if B >= 32:
        tb = min(tb, _round_up(pl.cdiv(B, 2), 16))

    if tb >= B:
        tb = B
    return tb


def _atloss_kernel(logits_ref, labels_ref, out_ref, *, total_rows, tile_rows):
    i = pl.program_id(0)

    logits = logits_ref[...].astype(jnp.float32)        # (TB, C) f32
    TB, C = logits.shape

    # (1, C) column-0 (threshold-class) indicator, broadcast against the tile.
    col = jax.lax.broadcasted_iota(jnp.int32, (1, C), 1)
    is_col0 = col == 0                                   # (1, C) bool

    # Binary multi-hot labels assumed ({0,1} is exact in bf16).  Build the
    # positive mask straight from the bf16 block -- no f32 widening -- and
    # force the threshold class (column 0) to "not positive".
    pos = jnp.logical_and(labels_ref[...] > 0, jnp.logical_not(is_col0))

    keep1 = jnp.logical_or(pos, is_col0)                 # positives + threshold
    keep2 = jnp.logical_not(pos)                         # negatives (incl. col0)

    neg_big = jnp.float32(-1e30)
    x1 = jnp.where(keep1, logits, neg_big)
    x2 = jnp.where(keep2, logits, neg_big)

    def lse(x):  # row-wise log-sum-exp, (TB, C) -> (TB, 1); two-max version
        m = jnp.max(x, axis=-1, keepdims=True)
        return m + jnp.log(jnp.sum(jnp.exp(x - m), axis=-1, keepdims=True))

    lse1 = lse(x1)                                       # (TB, 1)
    lse2 = lse(x2)                                       # (TB, 1)

    # loss1 = -sum(log_softmax(x1) * labels) = sum over positives (lse1 - logit)
    loss1 = jnp.sum(jnp.where(pos, lse1 - logits, 0.0), axis=-1, keepdims=True)
    # loss2 = -sum(log_softmax(x2) * th_label) = lse2 - logits[:, 0]
    loss2 = lse2 - logits[:, 0:1]

    # Mask rows of the last partial tile (data read past B is undefined).
    row = jax.lax.broadcasted_iota(jnp.int32, (TB, 1), 0)
    valid = row < (total_rows - i * tile_rows)
    per_row = jnp.where(valid, loss1 + loss2, 0.0)       # (TB, 1)

    # Lane-dense partial-sum block for this tile.
    out_ref[...] = jnp.full((1, 128), jnp.sum(per_row), dtype=jnp.float32)


def at_loss(logits, labels, *, tile_rows=None):
    """Pallas implementation of ATLoss.forward. Returns a scalar float32.

    Assumes binary {0,1} multi-hot labels (column 0 = threshold class).
    """
    B, C = logits.shape

    if labels.dtype != jnp.bfloat16:
        # Binary labels are exact in bf16 -> halves label HBM traffic.
        # TODO(synk): ship int8 labels from the upstream producer to cut the
        # label bytes further (and round tiles to 32 rows in that case).
        labels = labels.astype(jnp.bfloat16)

    tb = tile_rows if tile_rows is not None else _choose_tile_rows(B, C)
    grid = pl.cdiv(B, tb)

    tile_bytes = tb * C * 4
    # Cap well under the 64 MiB per-TC VMEM on v7x; floor at 16 MiB.
    vmem_limit_bytes = int(min(48 * 2**20, max(16 * 2**20, 12 * tile_bytes)))

    kernel = functools.partial(_atloss_kernel, total_rows=B, tile_rows=tb)

    partials = pl.pallas_call(
        kernel,
        out_shape=jax.ShapeDtypeStruct((grid, 128), jnp.float32),
        grid_spec=pltpu.PrefetchScalarGridSpec(
            num_scalar_prefetch=0,
            grid=(grid,),
            in_specs=[
                pl.BlockSpec((tb, C), lambda i: (i, 0)),
                pl.BlockSpec((tb, C), lambda i: (i, 0)),
            ],
            out_specs=pl.BlockSpec((1, 128), lambda i: (i, 0)),
        ),
        compiler_params=pltpu.CompilerParams(
            dimension_semantics=("parallel",),
            vmem_limit_bytes=vmem_limit_bytes,
        ),
    )(logits, labels)

    # Finish the mean in the wrapper (keeps the grid axis embarrassingly
    # parallel -- no shared accumulator across tiles).
    return jnp.sum(partials[:, 0]) / jnp.float32(B)


def at_loss_ref(logits, labels):
    """Pure-JAX reference mirroring the PyTorch semantics."""
    logits = logits.astype(jnp.float32)
    labels = labels.astype(jnp.float32)
    th_label = jnp.zeros_like(labels).at[:, 0].set(1.0)
    labels = labels.at[:, 0].set(0.0)
    p_mask = labels + th_label
    n_mask = 1.0 - labels
    logit1 = logits - (1.0 - p_mask) * 1e30
    loss1 = -jnp.sum(jax.nn.log_softmax(logit1, axis=-1) * labels, axis=1)
    logit2 = logits - (1.0 - n_mask) * 1e30
    loss2 = -jnp.sum(jax.nn.log_softmax(logit2, axis=-1) * th_label, axis=1)
    return jnp.mean(loss1 + loss2)


# TODO(synk): ATLoss.get_label (inference-time thresholding/top-k helper) is
# not part of forward() and is not implemented here.


if __name__ == "__main__":
    key = jax.random.PRNGKey(0)

    # Small check (single full-extent tile, grid == 1).
    k1, k2, k3, k4 = jax.random.split(key, 4)
    B, C = 8, 32  # batch x num_classes (class 0 = threshold class)
    logits = jax.random.normal(k1, (B, C), dtype=jnp.float32)
    labels_f32 = (jax.random.uniform(k2, (B, C)) > 0.7).astype(jnp.float32)
    labels_bf16 = labels_f32.astype(jnp.bfloat16)

    loss = at_loss(logits, labels_bf16)
    jax.block_until_ready(loss)
    ref = at_loss_ref(logits, labels_f32)
    assert jnp.allclose(loss, ref, rtol=1e-5, atol=1e-5), (loss, ref)

    # Medium check (grid == 2, partial last tile, non-128-multiple C).
    B2, C2 = 72, 100
    logits2 = jax.random.normal(k3, (B2, C2), dtype=jnp.float32)
    labels2_f32 = (jax.random.uniform(k4, (B2, C2)) > 0.85).astype(jnp.float32)
    loss2 = at_loss(logits2, labels2_f32.astype(jnp.bfloat16))
    jax.block_until_ready(loss2)
    ref2 = at_loss_ref(logits2, labels2_f32)
    assert jnp.allclose(loss2, ref2, rtol=1e-5, atol=1e-5), (loss2, ref2)

    print("KERNEL_OK")
</pallas_src>

<mosaic_0001>
module attributes {stable_mosaic.version = 11 : i64} {
  func.func @_atloss_kernel(%arg0: i32, %arg1: memref<8x32xf32, #tpu.memory_space<vmem>>, %arg2: memref<8x32xbf16, #tpu.memory_space<vmem>>, %arg3: memref<1x128xf32, #tpu.memory_space<vmem>>) attributes {dimension_semantics = [#tpu.dimension_semantics<parallel>], iteration_bounds = array<i64: 1>, scalar_prefetch = 0 : i64, scratch_operands = 0 : i64, tpu.core_type = #tpu.core_type<tc>, window_params = [{transform_indices = @transform_0, window_bounds = array<i64: 8, 32>}, {transform_indices = @transform_1, window_bounds = array<i64: 8, 32>}, {transform_indices = @transform_2, window_bounds = array<i64: 1, 128>}]} {
    %c0 = arith.constant 0 : index
    %c0_0 = arith.constant 0 : index
    %0 = vector.load %arg1[%c0, %c0_0] : memref<8x32xf32, #tpu.memory_space<vmem>>, vector<8x32xf32>
    %1 = tpu.iota {dimensions = array<i32: 1>} : vector<1x32xi32>
    %c0_i32 = arith.constant 0 : i32
    %2 = vector.broadcast %c0_i32 : i32 to vector<1x32xi32>
    %3 = arith.cmpi eq, %1, %2 : vector<1x32xi32>
    %c0_1 = arith.constant 0 : index
    %c0_2 = arith.constant 0 : index
    %4 = vector.load %arg2[%c0_1, %c0_2] : memref<8x32xbf16, #tpu.memory_space<vmem>>, vector<8x32xbf16>
    %cst = arith.constant 0.000000e+00 : bf16
    %5 = vector.broadcast %cst : bf16 to vector<8x32xbf16>
    %6 = arith.cmpf ogt, %4, %5 : vector<8x32xbf16>
    %cst_3 = arith.constant dense<true> : vector<1x32xi1>
    %7 = arith.xori %3, %cst_3 : vector<1x32xi1>
    %8 = vector.broadcast %7 : vector<1x32xi1> to vector<8x32xi1>
    %9 = arith.andi %6, %8 : vector<8x32xi1>
    %10 = vector.broadcast %3 : vector<1x32xi1> to vector<8x32xi1>
    %11 = arith.ori %9, %10 : vector<8x32xi1>
    %cst_4 = arith.constant dense<true> : vector<8x32xi1>
    %12 = arith.xori %9, %cst_4 : vector<8x32xi1>
    %cst_5 = arith.constant -1.000000e+30 : f32
    %13 = vector.broadcast %cst_5 : f32 to vector<8x32xf32>
    %14 = arith.select %11, %0, %13 : vector<8x32xi1>, vector<8x32xf32>
    %cst_6 = arith.constant -1.000000e+30 : f32
    %15 = vector.broadcast %cst_6 : f32 to vector<8x32xf32>
    %16 = arith.select %12, %0, %15 : vector<8x32xi1>, vector<8x32xf32>
    %cst_7 = arith.constant dense<0xFF800000> : vector<8xf32>
    %17 = vector.multi_reduction <maximumf>, %14, %cst_7 [1] : vector<8x32xf32> to vector<8xf32>
    %18 = vector.shape_cast %17 : vector<8xf32> to vector<8x1xf32>
    %19 = vector.broadcast %18 : vector<8x1xf32> to vector<8x32xf32>
    %20 = arith.subf %14, %19 : vector<8x32xf32>
    %21 = math.exp %20 : vector<8x32xf32>
    %cst_8 = arith.constant dense<0.000000e+00> : vector<8xf32>
    %22 = vector.multi_reduction <add>, %21, %cst_8 [1] : vector<8x32xf32> to vector<8xf32>
    %23 = vector.shape_cast %22 : vector<8xf32> to vector<8x1xf32>
    %24 = math.log %23 : vector<8x1xf32>
    %25 = arith.addf %18, %24 : vector<8x1xf32>
    %cst_9 = arith.constant dense<0xFF800000> : vector<8xf32>
    %26 = vector.multi_reduction <maximumf>, %16, %cst_9 [1] : vector<8x32xf32> to vector<8xf32>
    %27 = vector.shape_cast %26 : vector<8xf32> to vector<8x1xf32>
    %28 = vector.broadcast %27 : vector<8x1xf32> to vector<8x32xf32>
    %29 = arith.subf %16, %28 : vector<8x32xf32>
    %30 = math.exp %29 : vector<8x32xf32>
    %cst_10 = arith.constant dense<0.000000e+00> : vector<8xf32>
    %31 = vector.multi_reduction <add>, %30, %cst_10 [1] : vector<8x32xf32> to vector<8xf32>
    %32 = vector.shape_cast %31 : vector<8xf32> to vector<8x1xf32>
    %33 = math.log %32 : vector<8x1xf32>
    %34 = arith.addf %27, %33 : vector<8x1xf32>
    %35 = vector.broadcast %25 : vector<8x1xf32> to vector<8x32xf32>
    %36 = arith.subf %35, %0 : vector<8x32xf32>
    %cst_11 = arith.constant 0.000000e+00 : f32
    %37 = vector.broadcast %cst_11 : f32 to vector<8x32xf32>
    %38 = arith.select %9, %36, %37 : vector<8x32xi1>, vector<8x32xf32>
    %cst_12 = arith.constant dense<0.000000e+00> : vector<8xf32>
    %39 = vector.multi_reduction <add>, %38, %cst_12 [1] : vector<8x32xf32> to vector<8xf32>
    %40 = vector.shape_cast %39 : vector<8xf32> to vector<8x1xf32>
    %41 = vector.extract_strided_slice %0 {offsets = [0, 0], sizes = [8, 1], strides = [1, 1]} : vector<8x32xf32> to vector<8x1xf32>
    %42 = arith.subf %34, %41 : vector<8x1xf32>
    %43 = tpu.iota {dimensions = array<i32: 0>} : vector<8x1xi32>
    %c8_i32 = arith.constant 8 : i32
    %44 = arith.muli %arg0, %c8_i32 : i32
    %c8_i32_13 = arith.constant 8 : i32
    %45 = arith.subi %c8_i32_13, %44 : i32
    %46 = vector.broadcast %45 : i32 to vector<8x1xi32>
    %47 = arith.cmpi slt, %43, %46 : vector<8x1xi32>
    %48 = arith.addf %40, %42 : vector<8x1xf32>
    %cst_14 = arith.constant 0.000000e+00 : f32
    %49 = vector.broadcast %cst_14 : f32 to vector<8x1xf32>
    %50 = arith.select %47, %48, %49 : vector<8x1xi1>, vector<8x1xf32>
    %51 = vector.shape_cast %50 : vector<8x1xf32> to vector<1x8x1xf32>
    %cst_15 = arith.constant dense<0.000000e+00> : vector<1xf32>
    %52 = vector.multi_reduction <add>, %51, %cst_15 [1, 2] : vector<1x8x1xf32> to vector<1xf32>
    %53 = vector.shape_cast %52 : vector<1xf32> to vector<1x1x1xf32>
    %54 = vector.extract %53[0, 0, 0] : f32 from vector<1x1x1xf32>
    %55 = vector.broadcast %54 : f32 to vector<1x128xf32>
    %c0_16 = arith.constant 0 : index
    %c0_17 = arith.constant 0 : index
    %56 = vector.load %arg3[%c0_16, %c0_17] : memref<1x128xf32, #tpu.memory_space<vmem>>, vector<1x128xf32>
    tpu.vector_store %arg3[%c0_16, %c0_17], %55 {strides = array<i32>} : memref<1x128xf32, #tpu.memory_space<vmem>>, vector<1x128xf32>,
    return
  }
  func.func @transform_0(%arg0: i32) -> (i32, i32) {
    %c0_i32 = arith.constant 0 : i32
    %c0_i32_0 = arith.constant 0 : i32
    return %arg0, %c0_i32 : i32, i32
  }
  func.func @transform_1(%arg0: i32) -> (i32, i32) {
    %c0_i32 = arith.constant 0 : i32
    %c0_i32_0 = arith.constant 0 : i32
    return %arg0, %c0_i32 : i32, i32
  }
  func.func @transform_2(%arg0: i32) -> (i32, i32) {
    %c0_i32 = arith.constant 0 : i32
    %c0_i32_0 = arith.constant 0 : i32
    return %arg0, %c0_i32 : i32, i32
  }
}

</mosaic_0001>

<llo_original>
// kernel: tpu_custom_call.1
$region0: #{tpu_custom_call.1}
  #allocation0 [shape = 'u32[]', space=smem, size = 0x4, offset = 0x4, fixed_abs, tag = 'smem constant byte address 0x4 - core index']
  #allocation1 [shape = 'u32[72,128]{1,0:T(1,128)}', space=vmem, size = 0x9000, scoped, tag = 'internal scratch']
  %s0 = inlined_call_operand.hbm [shape: f32[8,32], index: 0, kind: input, shape index: {}]
  %s1 = inlined_call_operand.hbm [shape: bf16[8,32], index: 1, kind: input, shape index: {}]
  %s2 = inlined_call_operand.hbm [shape: f32[1,128], index: 2, kind: output, shape index: {}]
  %s3 = sld [smem:[#allocation0]]
  $region26: #{tpu_custom_call.1} parent=0
    _
  %s5 = ssub.s32 1, %s3
  %s6 = scalar_select 0, %s5, %s3
  $region1: #{tpu_custom_call.1} parent=0
    #allocation2 [shape = 'u8[4096]{0}', space=vmem, size = 0x1000, scoped, tag = 'input window, operand 0, single buffered']
    #allocation3 [shape = 's32[1]{0}', space=sflag, size = 0x4, scoped, tag = 'scoped memory for tpu_custom_call.1']
    #allocation4 [shape = 's32[1]{0}', space=sflag, size = 0x4, scoped, tag = 'scoped memory for tpu_custom_call.1']
    #allocation5 [shape = 'u8[2048]{0}', space=vmem, size = 0x800, scoped, tag = 'input window, operand 1, single buffered']
    #allocation6 [shape = 's32[1]{0}', space=sflag, size = 0x4, scoped, tag = 'scoped memory for tpu_custom_call.1']
    #allocation7 [shape = 'u8[512]{0}', space=vmem, size = 0x400, scoped, tag = 'output window, operand 0, single buffered']
    %7 = vsyncpa [#allocation3], 0
    %8 = vsyncpa [#allocation6], 0
    %9 = vsyncpa [#allocation4], 0
    // Predicated region
    $region2: #{tpu_custom_call.1} parent=1 // pred_check
      _
    $region3: #{tpu_custom_call.1} parent=1 // pred_check_branch
      %11 = sbr.rel (0) target = $region5
    $region4: #{tpu_custom_call.1} parent=1 // pred_region
      %13 = vsyncadd [#allocation3], 0
      %s15 = sshll.u32 %s0, 4
      %s16 = int_to_ptr.hbm [resolvable:$true] %s15
      %s17 = sshll.u32 [#allocation2], 4
      %s18 = int_to_ptr.vmem [resolvable:$true] %s17
      %20 = dma.hbm_to_vmem [thread:$0]  %s16, 128, %s18, [#allocation3]
    $region5: #{tpu_custom_call.1} parent=1 // pred_fallthru
      _
    // Predicated region
    $region6: #{tpu_custom_call.1} parent=1 // pred_check
      _
    $region7: #{tpu_custom_call.1} parent=1 // pred_check_branch
      %22 = sbr.rel (0) target = $region9
    $region8: #{tpu_custom_call.1} parent=1 // pred_region
      %24 = vsyncadd [#allocation6], 0
      %s26 = sshll.u32 %s1, 4
      %s27 = int_to_ptr.hbm [resolvable:$true] %s26
      %s28 = sshll.u32 [#allocation5], 4
      %s29 = int_to_ptr.vmem [resolvable:$true] %s28
      %31 = dma.hbm_to_vmem [thread:$0]  %s27, 64, %s29, [#allocation6]
    $region9: #{tpu_custom_call.1} parent=1 // pred_fallthru
      _
    // Predicated region
    $region10: #{tpu_custom_call.1} parent=1 // pred_check
      _
    $region11: #{tpu_custom_call.1} parent=1 // pred_check_branch
      %33 = sbr.rel (0) target = $region13
    $region12: #{tpu_custom_call.1} parent=1 // pred_region
      %35 = dma.done [#allocation3], 128
    $region13: #{tpu_custom_call.1} parent=1 // pred_fallthru
      _
    // Predicated region
    $region14: #{tpu_custom_call.1} parent=1 // pred_check
      _
    $region15: #{tpu_custom_call.1} parent=1 // pred_check_branch
      %37 = sbr.rel (0) target = $region17
    $region16: #{tpu_custom_call.1} parent=1 // pred_region
      %39 = dma.done [#allocation6], 64
    $region17: #{tpu_custom_call.1} parent=1 // pred_fallthru
      _
    %v40 = vld [vmem:[#allocation2] sm:$0xff]
    %v41 = vlaneseq
    %v42 = vand.u32 %v41, 127
    %vm43 = vcmp.eq.s32.totalorder %v42, 0
    %v44 = vld [vmem:[#allocation5] sm:$0xf]
    %v45 = vunpack.c.l.bf16 %v44
    %vm46 = vcmp.gt.f32.partialorder %v45, 0.0
    %vm47 = vmxor %vm43, 1
    %v48 = vsel %vm47, 1, 0
    %vm49 = vcmp.eq.s32.totalorder %v48, 1
    %vm50 = vmand %vm46, %vm49
    %v51 = vsel %vm43, 1, 0
    %vm52 = vcmp.eq.s32.totalorder %v51, 1
    %vm53 = vmor %vm50, %vm52
    %vm54 = vmxor %vm50, 1
    %v55 = vsel %vm53, %v40, -1e+30
    %v56 = vsel %vm54, %v40, -1e+30
    %vm57 = vcmask 261120
    %v58 = vsel %vm57, %v55, -inf
    %59 = vmax.xlane.f32.xlu0 %v58
    %v60 = vpop.xlane.xlu0 %59
    %v61 = vsub.f32 %v55, %v60
    %v62 = vmul.f32 %v61, 1.442695
    %v63 = vpow.pop %v62
    %v64 = vsel %vm57, %v63, 0.0
    %65 = vadd.xlane.f32.xlu0 %v64
    %v66 = vpop.xlane.xlu0 %65
    %v67 = vlog2.pop %v66
    %v68 = vmul.f32 %v67, 0.6931472
    %v69 = vadd.f32 %v60, %v68
    %v70 = vsel %vm57, %v56, -inf
    %71 = vmax.xlane.f32.xlu0 %v70
    %v72 = vpop.xlane.xlu0 %71
    %v73 = vsub.f32 %v56, %v72
    %v74 = vmul.f32 %v73, 1.442695
    %v75 = vpow.pop %v74
    %v76 = vsel %vm57, %v75, 0.0
    %77 = vadd.xlane.f32.xlu0 %v76
    %v78 = vpop.xlane.xlu0 %77
    %v79 = vlog2.pop %v78
    %v80 = vmul.f32 %v79, 0.6931472
    %v81 = vadd.f32 %v72, %v80
    %v82 = vsub.f32 %v69, %v40
    %v83 = vsel %vm50, %v82, 0.0
    %v84 = vsel %vm57, %v83, 0.0
    %85 = vadd.xlane.f32.xlu0 %v84
    %v86 = vpop.xlane.xlu0 %85
    %v87 = vsub.f32 %v81, %v40
    %v88 = vlaneseq
    %v89 = vshrl.u32 %v88, 7
    %s90 = smul.u32 0, 8
    %s91 = ssub.s32 8, %s90
    %v92 = vstv %s91
    %vm93 = vcmp.lt.s32.totalorder %v89, %v92
    %v94 = vadd.f32 %v86, %v87
    %v95 = vsel %vm93, %v94, 0.0
    %vm96 = vcmask 7168
    %v97 = vsel %vm96, %v95, 0.0
    %98 = vadd.xlane.f32.xlu0 %v97
    %v99 = vpop.xlane.xlu0 %98
    %v100 = vrot.slane %v99, 4
    %v101 = vadd.f32 %v99, %v100
    %v102 = vrot.slane %v101, 2
    %v103 = vadd.f32 %v101, %v102
    %v104 = vrot.slane %v103, 1
    %v105 = vadd.f32 %v103, %v104
    %s106 = vtos %v105
    %v107 = vstv %s106
    %108 = vst [vmem:[#allocation7] sm:$0x1] %v107
    // Predicated region
    $region18: #{tpu_custom_call.1} parent=1 // pred_check
      _
    $region19: #{tpu_custom_call.1} parent=1 // pred_check_branch
      %110 = sbr.rel (0) target = $region21
    $region20: #{tpu_custom_call.1} parent=1 // pred_region
      %112 = vsyncadd [#allocation4], 0
      %s114 = sshll.u32 [#allocation7], 4
      %s115 = int_to_ptr.vmem [resolvable:$true] %s114
      %s116 = sshll.u32 %s2, 4
      %s117 = int_to_ptr.hbm [resolvable:$true] %s116
      %119 = dma.vmem_to_hbm [thread:$0]  %s115, 16, %s117, [#allocation4]
    $region21: #{tpu_custom_call.1} parent=1 // pred_fallthru
      _
    // Predicated region
    $region22: #{tpu_custom_call.1} parent=1 // pred_check
      _
    $region23: #{tpu_custom_call.1} parent=1 // pred_check_branch
      %121 = sbr.rel (0) target = $region25
    $region24: #{tpu_custom_call.1} parent=1 // pred_region
      %123 = dma.done [#allocation4], 16
    $region25: #{tpu_custom_call.1} parent=1 // pred_fallthru
      _
    %124 = vsyncpa [#allocation3], 1
    %125 = vsyncpa [#allocation6], 1
    %126 = vsyncpa [#allocation4], 1

</llo_original>
